<compile_context>
chip_gen: v6e
topology: v6e:2x2x1
jax: 0.10.0
libtpu: 0.0.40
codegen_flags: <defaults>
</compile_context>

<pallas_src>
import functools
import math

import jax
import jax.numpy as jnp
from jax.experimental import pallas as pl
from jax.experimental.pallas import tpu as pltpu

_VMEM_LIMIT = 32 * 1024 * 1024  # explicit scoped-VMEM budget (safe on v5e/v6e/v7x)


def _round_up(x, m):
    return (x + m - 1) // m * m


# ----------------------------------------------------------------------------
# Kernel 1: tiled dense projection (no bias)  out[M, N] = x[M, K] @ w[K, N]
#           bf16 MXU operands, f32 accumulation.
# ----------------------------------------------------------------------------
def _matmul_accout_kernel(x_ref, w_ref, o_ref):
    # f32 output: accumulate directly into the resident output block (no scratch).
    @pl.when(pl.program_id(2) == 0)
    def _():
        o_ref[...] = jnp.zeros_like(o_ref)

    o_ref[...] += jnp.dot(x_ref[...], w_ref[...],
                          preferred_element_type=jnp.float32)


def _matmul_scratch_kernel(x_ref, w_ref, o_ref, acc_ref):
    # non-f32 output: keep an f32 VMEM accumulator, cast once on the last k step.
    @pl.when(pl.program_id(2) == 0)
    def _():
        acc_ref[...] = jnp.zeros_like(acc_ref)

    acc_ref[...] += jnp.dot(x_ref[...], w_ref[...],
                            preferred_element_type=jnp.float32)

    @pl.when(pl.program_id(2) == pl.num_programs(2) - 1)
    def _():
        o_ref[...] = acc_ref[...].astype(o_ref.dtype)


def dense(x, w, *, out_dtype=jnp.float32, tm=512, tn=512, tk=512):
    M, K = x.shape
    K2, N = w.shape
    assert K == K2

    # bf16 operands for the MXU; halves HBM/DMA traffic into the kernel.
    xb = x if x.dtype == jnp.bfloat16 else x.astype(jnp.bfloat16)
    wb = w if w.dtype == jnp.bfloat16 else w.astype(jnp.bfloat16)

    # Clamp tiles to the (quantum-rounded) problem and zero-pad instead of
    # falling back to whole-dimension blocks, so blocks stay VMEM-sized.
    tm = min(tm, _round_up(M, 8))
    tn = min(tn, _round_up(N, 128))
    tk = min(tk, _round_up(K, 128))
    Mp, Np, Kp = _round_up(M, tm), _round_up(N, tn), _round_up(K, tk)
    if (Mp, Kp) != (M, K):
        xb = jnp.pad(xb, ((0, Mp - M), (0, Kp - K)))
    if (Kp, Np) != (K, N):
        wb = jnp.pad(wb, ((0, Kp - K), (0, Np - N)))

    if out_dtype == jnp.float32:
        kernel, scratch = _matmul_accout_kernel, []
    else:
        kernel, scratch = _matmul_scratch_kernel, [pltpu.VMEM((tm, tn), jnp.float32)]

    out = pl.pallas_call(
        kernel,
        out_shape=jax.ShapeDtypeStruct((Mp, Np), out_dtype),
        grid_spec=pltpu.PrefetchScalarGridSpec(
            num_scalar_prefetch=0,
            grid=(Mp // tm, Np // tn, Kp // tk),
            in_specs=[
                pl.BlockSpec((tm, tk), lambda i, j, k: (i, k)),
                pl.BlockSpec((tk, tn), lambda i, j, k: (k, j)),
            ],
            out_specs=pl.BlockSpec((tm, tn), lambda i, j, k: (i, j)),
            scratch_shapes=scratch,
        ),
        compiler_params=pltpu.CompilerParams(
            dimension_semantics=("parallel", "parallel", "arbitrary"),
            vmem_limit_bytes=_VMEM_LIMIT,
        ),
    )(xb, wb)
    if (Mp, Np) != (M, N):
        out = out[:M, :N]
    return out


# ----------------------------------------------------------------------------
# Kernel 2: flash-style attention on head-major (tq, H)/(tkv, H) blocks.
#   Per-head online softmax (unrolled loop), heads merged lane-dense in the
#   epilogue: out block is (tq, H) -> full-128-lane HBM stores, no relayout pass.
# ----------------------------------------------------------------------------
def _flash_attn_kernel(q_ref, k_ref, v_ref, bias_ref, o_ref,
                       m_sc, l_sc, acc_sc, *, num_heads, head_dim):
    ki = pl.program_id(2)

    @pl.when(ki == 0)
    def _():
        m_sc[...] = jnp.full_like(m_sc, -jnp.inf)
        l_sc[...] = jnp.zeros_like(l_sc)
        acc_sc[...] = jnp.zeros_like(acc_sc)

    bias = bias_ref[...].astype(jnp.float32)              # (1, tkv)

    # TODO(synk): on v7x (2 TensorCores), a 2-4 head-chunk "parallel" grid axis
    # would feed both cores when B * (S/tq) is small; kept in-kernel here.
    for h in range(num_heads):
        lo = h * head_dim
        q_h = q_ref[:, lo:lo + head_dim]                  # (tq, D)  bf16, scale pre-folded
        k_h = k_ref[:, lo:lo + head_dim]                  # (tkv, D) bf16
        v_h = v_ref[:, lo:lo + head_dim]                  # (tkv, D) bf16

        # scores = q_h @ k_h^T with f32 accumulation on the MXU
        s = jax.lax.dot_general(
            q_h, k_h, (((1,), (1,)), ((), ())),
            preferred_element_type=jnp.float32)           # (tq, tkv)
        s = s + bias

        m_prev = m_sc[h]                                  # (tq, 1)
        m_new = jnp.maximum(m_prev, jnp.max(s, axis=-1, keepdims=True))
        alpha = jnp.exp(m_prev - m_new)
        p = jnp.exp(s - m_new)                            # (tq, tkv) f32
        l_sc[h] = alpha * l_sc[h] + jnp.sum(p, axis=-1, keepdims=True)
        acc_sc[h] = alpha * acc_sc[h] + jax.lax.dot_general(
            p.astype(v_h.dtype), v_h, (((1,), (0,)), ((), ())),
            preferred_element_type=jnp.float32)           # (tq, D)
        m_sc[h] = m_new

    @pl.when(ki == pl.num_programs(2) - 1)
    def _():
        # Fused head merge: writes cover the whole lane-dense (tq, H) block.
        for h in range(num_heads):
            lo = h * head_dim
            o_ref[:, lo:lo + head_dim] = (
                acc_sc[h] * pl.reciprocal(l_sc[h], approx=True)
            ).astype(o_ref.dtype)


def flash_attention(q, k, v, mask_bias, *, num_heads, tile=256,
                    out_dtype=jnp.bfloat16):
    # q, k, v: (B, S, H) head-major (H = num_heads * head_dim)
    # mask_bias: (B, 1, S) additive key bias (0.0 keep, -1e9 masked)
    B, S, H = q.shape
    assert H % num_heads == 0
    D = H // num_heads

    q = q.astype(jnp.bfloat16)
    k = k.astype(jnp.bfloat16)
    v = v.astype(jnp.bfloat16)
    mask_bias = mask_bias.astype(jnp.float32)

    if S <= tile:
        tq = tkv = Sp = S                       # single full-S block (legal: full dim)
    else:
        tq = tkv = tile
        Sp = _round_up(S, tile)
    if Sp != S:                                 # pad S; padded keys are masked out
        pad = ((0, 0), (0, Sp - S), (0, 0))
        q, k, v = (jnp.pad(t, pad) for t in (q, k, v))
        mask_bias = jnp.pad(mask_bias, ((0, 0), (0, 0), (0, Sp - S)),
                            constant_values=-1e9)

    kernel = functools.partial(_flash_attn_kernel,
                               num_heads=num_heads, head_dim=D)
    out = pl.pallas_call(
        kernel,
        out_shape=jax.ShapeDtypeStruct((B, Sp, H), out_dtype),
        grid_spec=pltpu.PrefetchScalarGridSpec(
            num_scalar_prefetch=0,
            grid=(B, Sp // tq, Sp // tkv),
            in_specs=[
                pl.BlockSpec((None, tq, H), lambda b, qi, ki: (b, qi, 0)),
                pl.BlockSpec((None, tkv, H), lambda b, qi, ki: (b, ki, 0)),
                pl.BlockSpec((None, tkv, H), lambda b, qi, ki: (b, ki, 0)),
                pl.BlockSpec((None, 1, tkv), lambda b, qi, ki: (b, 0, ki)),
            ],
            out_specs=pl.BlockSpec((None, tq, H), lambda b, qi, ki: (b, qi, 0)),
            scratch_shapes=[
                pltpu.VMEM((num_heads, tq, 1), jnp.float32),   # running max m
                pltpu.VMEM((num_heads, tq, 1), jnp.float32),   # running sum l
                pltpu.VMEM((num_heads, tq, D), jnp.float32),   # output accumulator
            ],
        ),
        compiler_params=pltpu.CompilerParams(
            dimension_semantics=("parallel", "parallel", "arbitrary"),
            vmem_limit_bytes=_VMEM_LIMIT,
        ),
    )(q, k, v, mask_bias)
    if Sp != S:
        out = out[:, :S, :]
    return out


# ----------------------------------------------------------------------------
# Module: T5Attention_tp (is_decoder=False -> self-attention, padding mask)
# ----------------------------------------------------------------------------
class T5AttentionTP:
    def __init__(self, hidden_size, num_heads, key, init_std=0.02, num_layers=2):
        assert hidden_size % num_heads == 0
        self.hidden_size = hidden_size
        self.num_heads = num_heads
        self.head_dim = hidden_size // num_heads
        k1, k2 = jax.random.split(key)
        # ParallelAttention: fused QKV projection (init_method_normal),
        # output projection (scaled_init_method_normal), both bias=False.
        self.w_qkv = (
            init_std * jax.random.normal(k1, (hidden_size, 3 * hidden_size))
        ).astype(jnp.float32)
        scaled_std = init_std / math.sqrt(2.0 * num_layers)
        self.w_out = (
            scaled_std * jax.random.normal(k2, (hidden_size, hidden_size))
        ).astype(jnp.float32)

    def __call__(self, hidden_states, mask=None):
        B, S, H = hidden_states.shape
        nH, D = self.num_heads, self.head_dim

        if mask is None:
            mask_bias = jnp.zeros((B, 1, S), dtype=jnp.float32)
        else:
            mask_bias = mask.astype(jnp.float32)

        # Single bf16 cast of the activations, reused by the three projections.
        x2d = hidden_states.reshape(B * S, H).astype(jnp.bfloat16)

        # Q/K/V as three GEMMs straight into head-major (B, S, H) layout: no HBM
        # transpose passes around the attention kernel.  1/sqrt(D) is folded into
        # the Q weight slice in f32 (one-time tiny parameter transform).
        scale = 1.0 / math.sqrt(D)
        w_q = self.w_qkv[:, :H] * scale
        w_k = self.w_qkv[:, H:2 * H]
        w_v = self.w_qkv[:, 2 * H:]
        q = dense(x2d, w_q, out_dtype=jnp.bfloat16).reshape(B, S, H)
        k = dense(x2d, w_k, out_dtype=jnp.bfloat16).reshape(B, S, H)
        v = dense(x2d, w_v, out_dtype=jnp.bfloat16).reshape(B, S, H)

        # KV-tiled online-softmax attention; heads merged lane-dense in-kernel.
        ctx = flash_attention(q, k, v, mask_bias, num_heads=nH)      # (B, S, H)

        # Output projection (bf16 MXU operands, f32 accumulate + f32 output).
        out = dense(ctx.reshape(B * S, H), self.w_out,
                    out_dtype=jnp.float32).reshape(B, S, H)

        # T5Attention_tp.forward returns (attention_output, None, None)
        return (out, None, None)


def _reference_forward(hidden_states, mask_bias, w_qkv, w_out, num_heads):
    """Pure-JAX f32 reference for correctness checking."""
    B, S, H = hidden_states.shape
    D = H // num_heads
    qkv = (hidden_states.reshape(B * S, H) @ w_qkv).reshape(B, S, 3, num_heads, D)
    q = jnp.transpose(qkv[:, :, 0], (0, 2, 1, 3))
    k = jnp.transpose(qkv[:, :, 1], (0, 2, 1, 3))
    v = jnp.transpose(qkv[:, :, 2], (0, 2, 1, 3))
    s = jnp.einsum("bhqd,bhkd->bhqk", q, k) / math.sqrt(D)
    s = s + mask_bias[:, :, None, :]          # (B, 1, 1, S) broadcast
    p = jax.nn.softmax(s, axis=-1)
    ctx = jnp.einsum("bhqk,bhkd->bhqd", p, v)
    ctx = jnp.transpose(ctx, (0, 2, 1, 3)).reshape(B * S, H)
    return (ctx @ w_out).reshape(B, S, H)


if __name__ == "__main__":
    B, S, H, nH = 2, 8, 32, 4

    key = jax.random.PRNGKey(0)
    k_param, k_x = jax.random.split(key)

    attn = T5AttentionTP(hidden_size=H, num_heads=nH, key=k_param)

    hidden_states = jax.random.normal(k_x, (B, S, H), dtype=jnp.float32)

    # Padding-style additive mask: batch 1 has its last 2 key positions masked.
    mask_bias = jnp.zeros((B, 1, S), dtype=jnp.float32)
    mask_bias = mask_bias.at[1, 0, S - 2:].set(-1e9)

    outputs = attn(hidden_states, mask=mask_bias)
    attention_output = jax.block_until_ready(outputs[0])

    assert attention_output.shape == (B, S, H)
    assert outputs[1] is None and outputs[2] is None
    assert bool(jnp.all(jnp.isfinite(attention_output)))

    ref = _reference_forward(hidden_states, mask_bias, attn.w_qkv, attn.w_out, nH)
    # Tolerance accounts for bf16 MXU operands / bf16 q,k,v,ctx activations and
    # the approx reciprocal in the softmax epilogue.
    err = float(jnp.max(jnp.abs(attention_output - ref)))
    assert bool(jnp.allclose(attention_output, ref, rtol=5e-2, atol=1e-3)), err

    print("KERNEL_OK")
</pallas_src>

<mosaic_0001>
module attributes {stable_mosaic.version = 11 : i64} {
  func.func @_matmul_scratch_kernel(%arg0: i32, %arg1: i32, %arg2: i32, %arg3: memref<16x128xbf16, #tpu.memory_space<vmem>>, %arg4: memref<128x128xbf16, #tpu.memory_space<vmem>>, %arg5: memref<16x128xbf16, #tpu.memory_space<vmem>>, %arg6: memref<16x128xf32, #tpu.memory_space<vmem>>) attributes {dimension_semantics = [#tpu.dimension_semantics<parallel>, #tpu.dimension_semantics<parallel>, #tpu.dimension_semantics<arbitrary>], iteration_bounds = array<i64: 1, 1, 1>, scalar_prefetch = 0 : i64, scratch_operands = 1 : i64, tpu.core_type = #tpu.core_type<tc>, window_params = [{transform_indices = @transform_0, window_bounds = array<i64: 16, 128>}, {transform_indices = @transform_1, window_bounds = array<i64: 128, 128>}, {transform_indices = @transform_2, window_bounds = array<i64: 16, 128>}]} {
    %c0_i32 = arith.constant 0 : i32
    %0 = arith.cmpi eq, %arg2, %c0_i32 : i32
    %1 = arith.extui %0 : i1 to i32
    %c0_i32_0 = arith.constant 0 : i32
    %2 = arith.cmpi ne, %1, %c0_i32_0 : i32
    scf.if %2 {
      %cst_10 = arith.constant 0.000000e+00 : f32
      %12 = vector.broadcast %cst_10 : f32 to vector<16x128xf32>
      %c0_11 = arith.constant 0 : index
      %c0_12 = arith.constant 0 : index
      %13 = vector.load %arg6[%c0_11, %c0_12] : memref<16x128xf32, #tpu.memory_space<vmem>>, vector<16x128xf32>
      tpu.vector_store %arg6[%c0_11, %c0_12], %12 {strides = array<i32>} : memref<16x128xf32, #tpu.memory_space<vmem>>, vector<16x128xf32>,
    } else {
    }
    %c0 = arith.constant 0 : index
    %c0_1 = arith.constant 0 : index
    %3 = vector.load %arg6[%c0, %c0_1] : memref<16x128xf32, #tpu.memory_space<vmem>>, vector<16x128xf32>
    %c0_2 = arith.constant 0 : index
    %c0_3 = arith.constant 0 : index
    %4 = vector.load %arg3[%c0_2, %c0_3] : memref<16x128xbf16, #tpu.memory_space<vmem>>, vector<16x128xbf16>
    %c0_4 = arith.constant 0 : index
    %c0_5 = arith.constant 0 : index
    %5 = vector.load %arg4[%c0_4, %c0_5] : memref<128x128xbf16, #tpu.memory_space<vmem>>, vector<128x128xbf16>
    %cst = arith.constant dense<0.000000e+00> : vector<16x128xf32>
    %6 = tpu.matmul %4, %5, %cst {dimension_numbers = #tpu.dot_dimension_numbers<[1], [0], [0], [1], [0, 0, 1, 1], [], []>} : vector<16x128xbf16>, vector<128x128xbf16>, vector<16x128xf32> -> vector<16x128xf32>
    %7 = arith.addf %3, %6 : vector<16x128xf32>
    %c0_6 = arith.constant 0 : index
    %c0_7 = arith.constant 0 : index
    %8 = vector.load %arg6[%c0_6, %c0_7] : memref<16x128xf32, #tpu.memory_space<vmem>>, vector<16x128xf32>
    tpu.vector_store %arg6[%c0_6, %c0_7], %7 {strides = array<i32>} : memref<16x128xf32, #tpu.memory_space<vmem>>, vector<16x128xf32>,
    %c0_i32_8 = arith.constant 0 : i32
    %9 = arith.cmpi eq, %arg2, %c0_i32_8 : i32
    %10 = arith.extui %9 : i1 to i32
    %c0_i32_9 = arith.constant 0 : i32
    %11 = arith.cmpi ne, %10, %c0_i32_9 : i32
    scf.if %11 {
      %c0_10 = arith.constant 0 : index
      %c0_11 = arith.constant 0 : index
      %12 = vector.load %arg6[%c0_10, %c0_11] : memref<16x128xf32, #tpu.memory_space<vmem>>, vector<16x128xf32>
      %13 = arith.truncf %12 : vector<16x128xf32> to vector<16x128xbf16>
      %c0_12 = arith.constant 0 : index
      %c0_13 = arith.constant 0 : index
      %14 = vector.load %arg5[%c0_12, %c0_13] : memref<16x128xbf16, #tpu.memory_space<vmem>>, vector<16x128xbf16>
      tpu.vector_store %arg5[%c0_12, %c0_13], %13 {strides = array<i32>} : memref<16x128xbf16, #tpu.memory_space<vmem>>, vector<16x128xbf16>,
    } else {
    }
    return
  }
  func.func @transform_0(%arg0: i32, %arg1: i32, %arg2: i32) -> (i32, i32) {
    %c0_i32 = arith.constant 0 : i32
    return %arg0, %arg2 : i32, i32
  }
  func.func @transform_1(%arg0: i32, %arg1: i32, %arg2: i32) -> (i32, i32) {
    %c0_i32 = arith.constant 0 : i32
    return %arg2, %arg1 : i32, i32
  }
  func.func @transform_2(%arg0: i32, %arg1: i32, %arg2: i32) -> (i32, i32) {
    %c0_i32 = arith.constant 0 : i32
    return %arg0, %arg1 : i32, i32
  }
}

</mosaic_0001>

<llo_original>
// kernel: tpu_custom_call.1
$region0: #{tpu_custom_call.1}
  #allocation0 [shape = 'u32[]', space=smem, size = 0x4, offset = 0x4, fixed_abs, tag = 'smem constant byte address 0x4 - core index']
  #allocation1 [shape = 'u32[144,128]{1,0:T(1,128)}', space=vmem, size = 0x12000, scoped, tag = 'internal scratch']
  #allocation2 [shape = 'f32[16,128]{1,0:T(8,128)}', space=vmem, size = 0x2000, scoped, tag = 'scratch operand']
  %s0 = inlined_call_operand.hbm [shape: bf16[16,128], index: 0, kind: input, shape index: {}]
  %s1 = inlined_call_operand.hbm [shape: bf16[128,128], index: 1, kind: input, shape index: {}]
  %s2 = inlined_call_operand.hbm [shape: bf16[16,128], index: 2, kind: output, shape index: {}]
  %s3 = sld [smem:[#allocation0]]
  $region34: #{tpu_custom_call.1} parent=0
    _
  %s5 = ssub.s32 1, %s3
  %s6 = scalar_select 0, %s5, %s3
  $region1: #{tpu_custom_call.1} parent=0
    #allocation3 [shape = 'u8[4096]{0}', space=vmem, size = 0x1000, scoped, tag = 'input window, operand 0, single buffered']
    #allocation4 [shape = 's32[1]{0}', space=sflag, size = 0x4, scoped, tag = 'scoped memory for tpu_custom_call.1']
    #allocation5 [shape = 's32[1]{0}', space=sflag, size = 0x4, scoped, tag = 'scoped memory for tpu_custom_call.1']
    #allocation6 [shape = 'u8[32768]{0}', space=vmem, size = 0x8000, scoped, tag = 'input window, operand 1, single buffered']
    #allocation7 [shape = 's32[1]{0}', space=sflag, size = 0x4, scoped, tag = 'scoped memory for tpu_custom_call.1']
    #allocation8 [shape = 'u8[4096]{0}', space=vmem, size = 0x1000, scoped, tag = 'output window, operand 0, single buffered']
    %7 = vsyncpa [#allocation4], 0
    %8 = vsyncpa [#allocation7], 0
    %9 = vsyncpa [#allocation5], 0
    // Predicated region
    $region2: #{tpu_custom_call.1} parent=1 // pred_check
      _
    $region3: #{tpu_custom_call.1} parent=1 // pred_check_branch
      %11 = sbr.rel (0) target = $region5
    $region4: #{tpu_custom_call.1} parent=1 // pred_region
      %s13 = ssub.s32 128, 128
      %14 = vsyncadd [#allocation4], %s13
      %s15 = sshll.u32 [#allocation3], 4
      %s16 = int_to_ptr.vmem [resolvable:$true] %s15
      %21 = dma.hbm_to_vmem [thread:$0]  %s0, 128, %s16, [#allocation4], 64, 64, 4
    $region5: #{tpu_custom_call.1} parent=1 // pred_fallthru
      _
    // Predicated region
    $region6: #{tpu_custom_call.1} parent=1 // pred_check
      _
    $region7: #{tpu_custom_call.1} parent=1 // pred_check_branch
      %23 = sbr.rel (0) target = $region9
    $region8: #{tpu_custom_call.1} parent=1 // pred_region
      %s25 = ssub.s32 1024, 1024
      %26 = vsyncadd [#allocation7], %s25
      %s27 = sshll.u32 [#allocation6], 4
      %s28 = int_to_ptr.vmem [resolvable:$true] %s27
      %33 = dma.hbm_to_vmem [thread:$0]  %s1, 1024, %s28, [#allocation7], 64, 64, 4
    $region9: #{tpu_custom_call.1} parent=1 // pred_fallthru
      _
    // Predicated region
    $region10: #{tpu_custom_call.1} parent=1 // pred_check
      _
    $region11: #{tpu_custom_call.1} parent=1 // pred_check_branch
      %35 = sbr.rel (0) target = $region13
    $region12: #{tpu_custom_call.1} parent=1 // pred_region
      %36 = dma.done [#allocation4], 128
    $region13: #{tpu_custom_call.1} parent=1 // pred_fallthru
      _
    // Predicated region
    $region14: #{tpu_custom_call.1} parent=1 // pred_check
      _
    $region15: #{tpu_custom_call.1} parent=1 // pred_check_branch
      %38 = sbr.rel (0) target = $region17
    $region16: #{tpu_custom_call.1} parent=1 // pred_region
      %39 = dma.done [#allocation7], 1024
    $region17: #{tpu_custom_call.1} parent=1 // pred_fallthru
      _
    %p41 = scmp.eq.s32.totalorder 0, 0
    // Predicated region
    $region18: #{tpu_custom_call.1} parent=1 // pred_check
      %p42 = pneg %p41
    $region19: #{tpu_custom_call.1} parent=1 // pred_check_branch
      %44 = sbr.rel (%p42) target = $region21
    $region20: #{tpu_custom_call.1} parent=1 // pred_region
      %45 = vst [vmem:[#allocation2] sm:$0xff] 0.0
      %46 = vst [vmem:[#allocation2 + $0x8] sm:$0xff] 0.0
    $region21: #{tpu_custom_call.1} parent=1 // pred_fallthru
      _
    %v47 = vld [vmem:[#allocation2] sm:$0xff]
    %v48 = vld [vmem:[#allocation2 + $0x8] sm:$0xff]
    %v49 = vld [vmem:[#allocation3] sm:$0xf]
    %v50 = vld [vmem:[#allocation3 + $0x4] sm:$0xf]
    %v51 = vld [vmem:[#allocation6] sm:$0xf]
    %v52 = vld [vmem:[#allocation6 + $0x4] sm:$0xf]
    %v53 = vld [vmem:[#allocation6 + $0x8] sm:$0xf]
    %v54 = vld [vmem:[#allocation6 + $0xc] sm:$0xf]
    %v55 = vld [vmem:[#allocation6 + $0x10] sm:$0xf]
    %v56 = vld [vmem:[#allocation6 + $0x14] sm:$0xf]
    %v57 = vld [vmem:[#allocation6 + $0x18] sm:$0xf]
    %v58 = vld [vmem:[#allocation6 + $0x1c] sm:$0xf]
    %v59 = vld [vmem:[#allocation6 + $0x20] sm:$0xf]
    %v60 = vld [vmem:[#allocation6 + $0x24] sm:$0xf]
    %v61 = vld [vmem:[#allocation6 + $0x28] sm:$0xf]
    %v62 = vld [vmem:[#allocation6 + $0x2c] sm:$0xf]
    %v63 = vld [vmem:[#allocation6 + $0x30] sm:$0xf]
    %v64 = vld [vmem:[#allocation6 + $0x34] sm:$0xf]
    %v65 = vld [vmem:[#allocation6 + $0x38] sm:$0xf]
    %v66 = vld [vmem:[#allocation6 + $0x3c] sm:$0xf]
    %v69 = vunpack.c.l.b16 %v49
    %v70 = vunpack.c.l.b16 %v50
    %v71 = vpack.c.b16 %v70, %v69
    %v89 = vunpack.c.l.b16 %v51
    %v90 = vunpack.c.l.b16 %v52
    %v91 = vunpack.c.l.b16 %v53
    %v92 = vunpack.c.l.b16 %v54
    %v93 = vunpack.c.l.b16 %v55
    %v94 = vunpack.c.l.b16 %v56
    %v95 = vunpack.c.l.b16 %v57
    %v96 = vunpack.c.l.b16 %v58
    %v97 = vunpack.c.l.b16 %v59
    %v98 = vunpack.c.l.b16 %v60
    %v99 = vunpack.c.l.b16 %v61
    %v100 = vunpack.c.l.b16 %v62
    %v101 = vunpack.c.l.b16 %v63
    %v102 = vunpack.c.l.b16 %v64
    %v103 = vunpack.c.l.b16 %v65
    %v104 = vunpack.c.l.b16 %v66
    %v105 = vpack.c.b16 %v90, %v89
    %v106 = vpack.c.b16 %v92, %v91
    %v107 = vpack.c.b16 %v94, %v93
    %v108 = vpack.c.b16 %v96, %v95
    %v109 = vpack.c.b16 %v98, %v97
    %v110 = vpack.c.b16 %v100, %v99
    %v111 = vpack.c.b16 %v102, %v101
    %v112 = vpack.c.b16 %v104, %v103
    %121 = vmatprep.subr.bf16.mxu0 0
    %122 = vmatpush1.bf16.msra.mxu0 %v112
    %123 = vmatprep.subr.bf16.mxu0 0
    %124 = vmatpush1.bf16.msra.mxu0 %v111
    %125 = vmatprep.subr.bf16.mxu0 0
    %126 = vmatpush1.bf16.msra.mxu0 %v110
    %127 = vmatprep.subr.bf16.mxu0 0
    %128 = vmatpush1.bf16.msra.mxu0 %v109
    %129 = vmatprep.subr.bf16.mxu0 0
    %130 = vmatpush1.bf16.msra.mxu0 %v108
    %131 = vmatprep.subr.bf16.mxu0 0
    %132 = vmatpush1.bf16.msra.mxu0 %v107
    %133 = vmatprep.subr.bf16.mxu0 0
    %134 = vmatpush1.bf16.msra.mxu0 %v106
    %135 = vmatprep.subr.bf16.mxu0 0
    %136 = vmatpush1.bf16.msra.mxu0 %v105
    %137 = vmatprep.subr.bf16.mxu0 0
    %138 = vmatpush2.bf16.msra.mxu0 0
    %139 = vmatprep.subr.bf16.mxu0 0
    %140 = vmatpush2.bf16.msra.mxu0 0
    %141 = vmatprep.subr.bf16.mxu0 0
    %142 = vmatpush2.bf16.msra.mxu0 0
    %143 = vmatprep.subr.bf16.mxu0 0
    %144 = vmatpush2.bf16.msra.mxu0 0
    %145 = vmatprep.subr.bf16.mxu0 0
    %146 = vmatpush2.bf16.msra.mxu0 0
    %147 = vmatprep.subr.bf16.mxu0 0
    %148 = vmatpush2.bf16.msra.mxu0 0
    %149 = vmatprep.subr.bf16.mxu0 0
    %150 = vmatpush2.bf16.msra.mxu0 0
    %151 = vmatprep.subr.bf16.mxu0 0
    %152 = vmatpush2.bf16.msra.mxu0 0
    %153 = vmatprep.mubr.bf16.mxu0 0
    %154 = vmatmul.mubr.bf16.gmra.mxu0 %v71
    %v155 = vpop.f32.mrf.mxu0
    %v156 = vadd.f32 0.0, %v155
    %v157 = vpop.f32.mrf.mxu0
    %v158 = vpop.f32.mrf.mxu0
    %v159 = vadd.f32 0.0, %v158
    %v160 = vpop.f32.mrf.mxu0
    %161 = vdwg.mxu0
    %v162 = vadd.f32 %v47, %v156
    %v163 = vadd.f32 %v48, %v159
    %164 = vst [vmem:[#allocation2] sm:$0xff] %v162
    %165 = vst [vmem:[#allocation2 + $0x8] sm:$0xff] %v163
    // Predicated region
    $region22: #{tpu_custom_call.1} parent=1 // pred_check
      %p166 = pneg %p41
    $region23: #{tpu_custom_call.1} parent=1 // pred_check_branch
      %168 = sbr.rel (%p166) target = $region25
    $region24: #{tpu_custom_call.1} parent=1 // pred_region
      %v169 = vld [vmem:[#allocation2] sm:$0xff]
      %v170 = vld [vmem:[#allocation2 + $0x8] sm:$0xff]
      %v171 = vpack.c.bf16 %v170, %v169
      %v173 = vunpack.c.l.b16 %v171
      %v174 = vunpack.c.h.b16 %v171
      %v175 = vpack.c.b16 %v173, %v173
      %v176 = vpack.c.b16 %v174, %v174
      %179 = vst [vmem:[#allocation8] sm:$0xf] %v175
      %180 = vst [vmem:[#allocation8 + $0x4] sm:$0xf] %v176
    $region25: #{tpu_custom_call.1} parent=1 // pred_fallthru
      _
    // Predicated region
    $region26: #{tpu_custom_call.1} parent=1 // pred_check
      _
    $region27: #{tpu_custom_call.1} parent=1 // pred_check_branch
      %182 = sbr.rel (0) target = $region29
    $region28: #{tpu_custom_call.1} parent=1 // pred_region
      %s184 = ssub.s32 128, 128
      %185 = vsyncadd [#allocation5], %s184
      %s186 = sshll.u32 [#allocation8], 4
      %s187 = int_to_ptr.vmem [resolvable:$true] %s186
      %192 = dma.vmem_to_hbm [thread:$0]  %s187, 128, %s2, [#allocation5], 64, 64, 4
    $region29: #{tpu_custom_call.1} parent=1 // pred_fallthru
      _
    // Predicated region
    $region30: #{tpu_custom_call.1} parent=1 // pred_check
      _
    $region31: #{tpu_custom_call.1} parent=1 // pred_check_branch
      %194 = sbr.rel (0) target = $region33
    $region32: #{tpu_custom_call.1} parent=1 // pred_region
      %195 = dma.done [#allocation5], 128
    $region33: #{tpu_custom_call.1} parent=1 // pred_fallthru
      _
    %196 = vsyncpa [#allocation4], 1
    %197 = vsyncpa [#allocation7], 1
    %198 = vsyncpa [#allocation5], 1

</llo_original>
